<compile_context>
chip_gen: v7x
topology: tpu7x:2x2x1
jax: 0.10.0
libtpu: 0.0.40
codegen_flags: <defaults>
</compile_context>

<pallas_src>
import numpy as np

import jax
import jax.numpy as jnp
from jax.experimental import pallas as pl
from jax.experimental.pallas import tpu as pltpu

_LN_EPS = 1e-5          # torch.nn.LayerNorm default eps
_MASK_VAL = -1e9        # float32 masking value of the reference module
_HI = jax.lax.Precision.HIGHEST


def _group_attention_kernel(ctx_ref, eos_ref, prior_ref,
                            gamma_ref, beta_ref, wqk_ref, bqk_ref, out_ref):
    Bt, _, S = eos_ref.shape           # eos block: (Bt, 1, S)
    D = ctx_ref.shape[-1]              # ctx block: (Bt*S, D)
    inv_s = jnp.float32(1.0 / S)

    # Structural selectors from iota compares (no DMA, no resident mask VMEM).
    row = jax.lax.broadcasted_iota(jnp.int32, (S, S), 0)
    col = jax.lax.broadcasted_iota(jnp.int32, (S, S), 1)
    diag_b = col == row
    upper_b = col > row
    sup_f = (col == row + 1).astype(jnp.float32)     # superdiagonal
    sub_f = (col == row - 1).astype(jnp.float32)     # subdiagonal
    upper_f = upper_b.astype(jnp.float32)
    loweq_f = (col <= row).astype(jnp.float32)
    col0_b = jax.lax.broadcasted_iota(jnp.int32, (1, S), 1) == 0
    sign = jnp.where(upper_b, jnp.float32(1.0), jnp.float32(-1.0))

    # ---- LayerNorm fused over the folded batch: one (Bt*S, D) slab ----
    x = ctx_ref[...]
    mean = jnp.mean(x, axis=-1, keepdims=True)
    var = jnp.mean((x - mean) ** 2, axis=-1, keepdims=True)
    xn = (x - mean) * jax.lax.rsqrt(var + _LN_EPS)
    xn = xn * gamma_ref[...] + beta_ref[...]

    # ---- Fused Q|K projection: a single (Bt*S, D) @ (D, 2D) MXU matmul.
    # The 1/(d_model//2) score scale is folded into the Q half on the host.
    qk = jnp.dot(xn, wqk_ref[...],
                 preferred_element_type=jnp.float32) + bqk_ref[...]

    eos = eos_ref[...]                 # (Bt, 1, S) f32 0/1
    pr = prior_ref[...]                # (Bt, S, S)

    # ---- per batch-element S x S section (statically unrolled, all ops 2D) --
    for b in range(Bt):
        q = qk[b * S:(b + 1) * S, :D]          # (S, D)
        k = qk[b * S:(b + 1) * S, D:]          # (S, D)
        eos_b = eos[b]                         # (1, S)
        pr_b = pr[b]                           # (S, S)

        # Scores: tiny MXU matmul; only |i-j| == 1 survives the mask, so the
        # band is extracted with masked lane-reductions and the softmax
        # collapses to a 2-way softmax (2S exps instead of S^2).
        scores = jnp.einsum('qd,kd->qk', q, k,
                            preferred_element_type=jnp.float32)
        s_up = jnp.sum(sup_f * scores, axis=-1, keepdims=True)    # q_i . k_{i+1}
        s_dn = jnp.sum(sub_f * scores, axis=-1, keepdims=True)    # q_i . k_{i-1}
        keep_up = jnp.sum(sup_f * eos_b, axis=-1, keepdims=True)  # eos[i+1] & exists
        keep_dn = jnp.sum(sub_f * eos_b, axis=-1, keepdims=True)  # eos[i-1] & exists

        # additive band/eos bias (same -1e9 sentinel as the reference)
        s_up = s_up + (1.0 - keep_up) * _MASK_VAL
        s_dn = s_dn + (1.0 - keep_dn) * _MASK_VAL
        m = jnp.maximum(s_up, s_dn)
        e_up = jnp.exp(s_up - m)
        e_dn = jnp.exp(s_dn - m)
        denom = e_up + e_dn                    # exact divide: tiny vector
        p_up = e_up / denom
        p_dn = e_dn / denom

        # scatter the 2 surviving values back onto the band; rows with both
        # neighbours masked reproduce the reference's uniform-1/S sentinel row.
        p = sup_f * p_up + sub_f * p_dn
        p = jnp.where((keep_up + keep_dn) == 0.0, inv_s, p)

        # symmetric neighbour attention + prior mixing (single 2D transpose)
        neibor = jnp.sqrt(p * p.T + 1e-9)
        neibor = pr_b + (1.0 - pr_b) * neibor

        # tri-matrix log/exp chain as an exact exclusive prefix sum over the
        # superdiagonal: g[i,k] = exp(Cprev[k] - Cprev[i]) for k > i, with
        # Cprev = exclusive cumsum of log(neibor[i, i+1] + 1e-9).  Only the
        # superdiagonal is logged (2S logs, not S^2); no S^3 MXU work.
        sup_col = jnp.sum(sup_f * neibor, axis=-1, keepdims=True)   # (S,1)
        sup_row = jnp.sum(sup_f * neibor, axis=0, keepdims=True)    # (1,S)
        l_col = jnp.log(sup_col + 1e-9)        # row S-1 never used (upper mask)
        l_row = jnp.where(col0_b, 0.0, jnp.log(sup_row + 1e-9))
        cprev_row = jnp.sum(l_col * upper_f, axis=0, keepdims=True)   # Cprev[k]
        cprev_col = jnp.sum(l_row * loweq_f, axis=-1, keepdims=True)  # Cprev[i]
        diff = cprev_row - cprev_col

        # g + g.T via a sign flip below the diagonal (no second transpose)
        g = jnp.where(diag_b, 0.0, jnp.exp(diff * sign))
        g = g + jnp.where(diag_b, neibor, jnp.float32(1e-9))

        # single merged output block -> one writeback DMA per grid step
        out_ref[b, 0] = g
        out_ref[b, 1] = neibor


def _num_tensorcores():
    """Best-effort TensorCores-per-chip query (v7x: 2, v5e/v6e: 1)."""
    try:
        info = pltpu.get_tpu_info()
    except Exception:
        return 1
    for attr in ("num_cores", "num_tensorcores", "tensorcore_count",
                 "cores_per_chip", "core_count"):
        v = getattr(info, attr, None)
        if isinstance(v, int) and v > 0:
            return v
    return 1


def _choose_batch_tile(B, S):
    """Generation-aware batch folding: fold as many batch elements per grid
    step as possible (amortizes ~0.35us/step, widens the projection matmul's
    M dim, halves tiny DMAs); only keep >= num_TC grid steps when the chip
    actually has more than one TensorCore (v7x).  On single-TC v5e/v6e the
    grid is a serial loop, so splitting tiny steps is pure overhead."""
    max_rows = 512                      # keep the folded (Bt*S, 2D) slab small
    divisors = [d for d in range(1, B + 1) if B % d == 0]
    fit = [d for d in divisors if d * S <= max_rows] or [1]
    bt = max(fit)
    n_tc = _num_tensorcores()
    if n_tc > 1:
        # TODO(synk): benchmark the fat single step vs the cross-TC split on
        # v7x; two sub-microsecond steps may not pay for their overhead.
        while bt > 1 and B // bt < n_tc:
            smaller = [d for d in fit if d < bt]
            if not smaller:
                break
            bt = max(smaller)
    return bt


def group_attention(context, eos_mask, prior, params, batch_tile=None):
    B, S, D = context.shape
    d_half = D // 2
    bt = batch_tile if batch_tile is not None else _choose_batch_tile(B, S)
    assert B % bt == 0, "batch tile must divide the batch"
    grid = (B // bt,)

    # Host-side prep (one-time / free):
    ctx2 = context.reshape(B * S, D)           # avoids an in-kernel reshape
    eos3 = eos_mask.astype(jnp.float32).reshape(B, 1, S)
    inv = jnp.float32(1.0 / d_half)
    wqk = jnp.concatenate([params["wq"] * inv, params["wk"]], axis=1)  # (D,2D)
    bqk = jnp.concatenate([params["bq"] * inv, params["bk"]], axis=1)  # (1,2D)

    const2 = lambda g: (0, 0)
    batch2 = lambda g: (g, 0)
    batch3 = lambda g: (g, 0, 0)
    batch4 = lambda g: (g, 0, 0, 0)

    out = pl.pallas_call(
        _group_attention_kernel,
        out_shape=jax.ShapeDtypeStruct((B, 2, S, S), jnp.float32),
        grid_spec=pltpu.PrefetchScalarGridSpec(
            num_scalar_prefetch=0,
            grid=grid,
            in_specs=[
                pl.BlockSpec((bt * S, D), batch2),   # folded context rows
                pl.BlockSpec((bt, 1, S), batch3),    # eos mask (f32)
                pl.BlockSpec((bt, S, S), batch3),    # prior
                pl.BlockSpec((1, D), const2),        # LN gamma      (resident)
                pl.BlockSpec((1, D), const2),        # LN beta       (resident)
                pl.BlockSpec((D, 2 * D), const2),    # [Wq*inv | Wk] (resident)
                pl.BlockSpec((1, 2 * D), const2),    # [bq*inv | bk] (resident)
            ],
            out_specs=pl.BlockSpec((bt, 2, S, S), batch4),   # g & neibor merged
        ),
        compiler_params=pltpu.CompilerParams(
            dimension_semantics=("parallel",)),
    )(ctx2, eos3, prior, params["gamma"], params["beta"], wqk, bqk)
    return out[:, 0], out[:, 1]


def _reference(context, eos_mask, prior, params):
    """Pure-JAX reproduction of the PyTorch forward, for verification."""
    B, S, D = context.shape
    d_half = D // 2
    mean = jnp.mean(context, -1, keepdims=True)
    var = jnp.mean((context - mean) ** 2, -1, keepdims=True)
    xn = (context - mean) / jnp.sqrt(var + _LN_EPS)
    xn = xn * params["gamma"] + params["beta"]
    q = jnp.einsum("bsd,de->bse", xn, params["wq"], precision=_HI) + params["bq"]
    k = jnp.einsum("bsd,de->bse", xn, params["wk"], precision=_HI) + params["bk"]
    scores = jnp.einsum("bqd,bkd->bqk", q, k, precision=_HI) / float(d_half)

    row = jax.lax.broadcasted_iota(jnp.int32, (S, S), 0)
    col = jax.lax.broadcasted_iota(jnp.int32, (S, S), 1)
    a_mat = col == row + 1
    c_mat = col == row - 1
    diag = col == row
    tri = (col >= row).astype(jnp.float32)

    mask = (eos_mask[:, None, :] != 0) & (a_mat | c_mat)[None]
    scores = jnp.where(mask, scores, _MASK_VAL)
    p = jax.nn.softmax(scores, axis=-1)
    neibor = jnp.sqrt(p * jnp.swapaxes(p, -1, -2) + 1e-9)
    neibor = prior + (1.0 - prior) * neibor
    t_in = jnp.where(a_mat[None], jnp.log(neibor + 1e-9), 0.0)
    t = jnp.einsum("bij,jk->bik", t_in, tri, precision=_HI)
    g = jnp.exp(jnp.einsum("ij,bjk->bik", tri, t, precision=_HI))
    g = jnp.where((col > row)[None], g, 0.0)
    g_out = g + jnp.swapaxes(g, -1, -2) + jnp.where(diag[None], neibor, 1e-9)
    return g_out, neibor


if __name__ == "__main__":
    B, S, D = 2, 16, 32
    key = jax.random.PRNGKey(0)
    k1, k2, k3, k4, k5, k6 = jax.random.split(key, 6)

    context = jax.random.normal(k1, (B, S, D), dtype=jnp.float32)
    eos_np = np.ones((B, S), dtype=np.int32)
    eos_np[0, -2:] = 0      # simulate padding at the end of sequence 0
    eos_mask = jnp.asarray(eos_np)
    prior = jax.random.uniform(k2, (B, S, S), dtype=jnp.float32) * 0.5

    params = {
        "gamma": jnp.ones((1, D), jnp.float32),
        "beta": jnp.zeros((1, D), jnp.float32),
        "wq": 0.05 * jax.random.normal(k3, (D, D), dtype=jnp.float32),
        "bq": 0.01 * jax.random.normal(k4, (1, D), dtype=jnp.float32),
        "wk": 0.05 * jax.random.normal(k5, (D, D), dtype=jnp.float32),
        "bk": 0.01 * jax.random.normal(k6, (1, D), dtype=jnp.float32),
    }
    # TODO(synk): nn.Dropout(0.8) is declared in __init__ but never applied in
    # forward(), so it is intentionally omitted here.

    g_attn, neibor_attn = group_attention(context, eos_mask, prior, params)
    jax.block_until_ready((g_attn, neibor_attn))

    g_ref, n_ref = _reference(context, eos_mask, prior, params)
    np.testing.assert_allclose(np.asarray(neibor_attn), np.asarray(n_ref),
                               rtol=1e-2, atol=1e-2)
    np.testing.assert_allclose(np.asarray(g_attn), np.asarray(g_ref),
                               rtol=1e-2, atol=1e-2)

    print("KERNEL_OK")
</pallas_src>

<mosaic_0001>
module attributes {stable_mosaic.version = 11 : i64} {
  func.func @_group_attention_kernel(%arg0: i32, %arg1: memref<32x32xf32, #tpu.memory_space<vmem>>, %arg2: memref<2x1x16xf32, #tpu.memory_space<vmem>>, %arg3: memref<2x16x16xf32, #tpu.memory_space<vmem>>, %arg4: memref<1x32xf32, #tpu.memory_space<vmem>>, %arg5: memref<1x32xf32, #tpu.memory_space<vmem>>, %arg6: memref<32x64xf32, #tpu.memory_space<vmem>>, %arg7: memref<1x64xf32, #tpu.memory_space<vmem>>, %arg8: memref<2x2x16x16xf32, #tpu.memory_space<vmem>>) attributes {dimension_semantics = [#tpu.dimension_semantics<parallel>], iteration_bounds = array<i64: 1>, scalar_prefetch = 0 : i64, scratch_operands = 0 : i64, tpu.core_type = #tpu.core_type<tc>, window_params = [{transform_indices = @transform_0, window_bounds = array<i64: 32, 32>}, {transform_indices = @transform_1, window_bounds = array<i64: 2, 1, 16>}, {transform_indices = @transform_2, window_bounds = array<i64: 2, 16, 16>}, {pipeline_mode = #tpu.pipeline_mode<synchronous>, transform_indices = @transform_3, window_bounds = array<i64: 1, 32>}, {pipeline_mode = #tpu.pipeline_mode<synchronous>, transform_indices = @transform_4, window_bounds = array<i64: 1, 32>}, {pipeline_mode = #tpu.pipeline_mode<synchronous>, transform_indices = @transform_5, window_bounds = array<i64: 32, 64>}, {pipeline_mode = #tpu.pipeline_mode<synchronous>, transform_indices = @transform_6, window_bounds = array<i64: 1, 64>}, {transform_indices = @transform_7, window_bounds = array<i64: 2, 2, 16, 16>}]} {
    %0 = tpu.iota {dimensions = array<i32: 0>} : vector<16x16xi32>
    %1 = tpu.iota {dimensions = array<i32: 1>} : vector<16x16xi32>
    %2 = arith.cmpi eq, %1, %0 : vector<16x16xi32>
    %3 = arith.cmpi sgt, %1, %0 : vector<16x16xi32>
    %c1_i32 = arith.constant 1 : i32
    %4 = vector.broadcast %c1_i32 : i32 to vector<16x16xi32>
    %5 = arith.addi %0, %4 : vector<16x16xi32>
    %6 = arith.cmpi eq, %1, %5 : vector<16x16xi32>
    %7 = arith.extui %6 : vector<16x16xi1> to vector<16x16xi32>
    %8 = arith.sitofp %7 : vector<16x16xi32> to vector<16x16xf32>
    %c1_i32_0 = arith.constant 1 : i32
    %9 = vector.broadcast %c1_i32_0 : i32 to vector<16x16xi32>
    %10 = arith.subi %0, %9 : vector<16x16xi32>
    %11 = arith.cmpi eq, %1, %10 : vector<16x16xi32>
    %12 = arith.extui %11 : vector<16x16xi1> to vector<16x16xi32>
    %13 = arith.sitofp %12 : vector<16x16xi32> to vector<16x16xf32>
    %14 = arith.extui %3 : vector<16x16xi1> to vector<16x16xi32>
    %15 = arith.sitofp %14 : vector<16x16xi32> to vector<16x16xf32>
    %16 = arith.cmpi sle, %1, %0 : vector<16x16xi32>
    %17 = arith.extui %16 : vector<16x16xi1> to vector<16x16xi32>
    %18 = arith.sitofp %17 : vector<16x16xi32> to vector<16x16xf32>
    %19 = tpu.iota {dimensions = array<i32: 1>} : vector<1x16xi32>
    %c0_i32 = arith.constant 0 : i32
    %20 = vector.broadcast %c0_i32 : i32 to vector<1x16xi32>
    %21 = arith.cmpi eq, %19, %20 : vector<1x16xi32>
    %cst = arith.constant 1.000000e+00 : f32
    %cst_1 = arith.constant -1.000000e+00 : f32
    %22 = vector.broadcast %cst : f32 to vector<16x16xf32>
    %23 = vector.broadcast %cst_1 : f32 to vector<16x16xf32>
    %24 = arith.select %3, %22, %23 : vector<16x16xi1>, vector<16x16xf32>
    %c0 = arith.constant 0 : index
    %c0_2 = arith.constant 0 : index
    %25 = vector.load %arg1[%c0, %c0_2] : memref<32x32xf32, #tpu.memory_space<vmem>>, vector<32x32xf32>
    %cst_3 = arith.constant dense<0.000000e+00> : vector<32xf32>
    %26 = vector.multi_reduction <add>, %25, %cst_3 [1] : vector<32x32xf32> to vector<32xf32>
    %27 = vector.shape_cast %26 : vector<32xf32> to vector<32x1xf32>
    %cst_4 = arith.constant 3.200000e+01 : f32
    %28 = vector.broadcast %cst_4 : f32 to vector<32x1xf32>
    %29 = arith.divf %27, %28 : vector<32x1xf32>
    %30 = vector.broadcast %29 : vector<32x1xf32> to vector<32x32xf32>
    %31 = arith.subf %25, %30 : vector<32x32xf32>
    %32 = arith.mulf %31, %31 : vector<32x32xf32>
    %cst_5 = arith.constant dense<0.000000e+00> : vector<32xf32>
    %33 = vector.multi_reduction <add>, %32, %cst_5 [1] : vector<32x32xf32> to vector<32xf32>
    %34 = vector.shape_cast %33 : vector<32xf32> to vector<32x1xf32>
    %cst_6 = arith.constant 3.200000e+01 : f32
    %35 = vector.broadcast %cst_6 : f32 to vector<32x1xf32>
    %36 = arith.divf %34, %35 : vector<32x1xf32>
    %37 = vector.broadcast %29 : vector<32x1xf32> to vector<32x32xf32>
    %38 = arith.subf %25, %37 : vector<32x32xf32>
    %cst_7 = arith.constant 9.99999974E-6 : f32
    %39 = vector.broadcast %cst_7 : f32 to vector<32x1xf32>
    %40 = arith.addf %36, %39 : vector<32x1xf32>
    %41 = math.rsqrt %40 : vector<32x1xf32>
    %42 = vector.broadcast %41 : vector<32x1xf32> to vector<32x32xf32>
    %43 = arith.mulf %38, %42 : vector<32x32xf32>
    %c0_8 = arith.constant 0 : index
    %c0_9 = arith.constant 0 : index
    %44 = vector.load %arg4[%c0_8, %c0_9] : memref<1x32xf32, #tpu.memory_space<vmem>>, vector<1x32xf32>
    %45 = vector.broadcast %44 : vector<1x32xf32> to vector<32x32xf32>
    %46 = arith.mulf %43, %45 : vector<32x32xf32>
    %c0_10 = arith.constant 0 : index
    %c0_11 = arith.constant 0 : index
    %47 = vector.load %arg5[%c0_10, %c0_11] : memref<1x32xf32, #tpu.memory_space<vmem>>, vector<1x32xf32>
    %48 = vector.broadcast %47 : vector<1x32xf32> to vector<32x32xf32>
    %49 = arith.addf %46, %48 : vector<32x32xf32>
    %c0_12 = arith.constant 0 : index
    %c0_13 = arith.constant 0 : index
    %50 = vector.load %arg6[%c0_12, %c0_13] : memref<32x64xf32, #tpu.memory_space<vmem>>, vector<32x64xf32>
    %cst_14 = arith.constant dense<0.000000e+00> : vector<32x64xf32>
    %51 = tpu.matmul %49, %50, %cst_14 {dimension_numbers = #tpu.dot_dimension_numbers<[1], [0], [0], [1], [0, 0, 1, 1], [], []>} : vector<32x32xf32>, vector<32x64xf32>, vector<32x64xf32> -> vector<32x64xf32>
    %c0_15 = arith.constant 0 : index
    %c0_16 = arith.constant 0 : index
    %52 = vector.load %arg7[%c0_15, %c0_16] : memref<1x64xf32, #tpu.memory_space<vmem>>, vector<1x64xf32>
    %53 = vector.broadcast %52 : vector<1x64xf32> to vector<32x64xf32>
    %54 = arith.addf %51, %53 : vector<32x64xf32>
    %c0_17 = arith.constant 0 : index
    %c0_18 = arith.constant 0 : index
    %c0_19 = arith.constant 0 : index
    %55 = vector.load %arg2[%c0_17, %c0_18, %c0_19] : memref<2x1x16xf32, #tpu.memory_space<vmem>>, vector<2x1x16xf32>
    %c0_20 = arith.constant 0 : index
    %c0_21 = arith.constant 0 : index
    %c0_22 = arith.constant 0 : index
    %56 = vector.load %arg3[%c0_20, %c0_21, %c0_22] : memref<2x16x16xf32, #tpu.memory_space<vmem>>, vector<2x16x16xf32>
    %57 = vector.extract_strided_slice %54 {offsets = [0, 0], sizes = [16, 32], strides = [1, 1]} : vector<32x64xf32> to vector<16x32xf32>
    %58 = vector.extract_strided_slice %54 {offsets = [0, 32], sizes = [16, 32], strides = [1, 1]} : vector<32x64xf32> to vector<16x32xf32>
    %59 = vector.extract_strided_slice %55 {offsets = [0, 0, 0], sizes = [1, 1, 16], strides = [1, 1, 1]} : vector<2x1x16xf32> to vector<1x1x16xf32>
    %60 = vector.shape_cast %59 : vector<1x1x16xf32> to vector<1x16xf32>
    %61 = vector.extract_strided_slice %56 {offsets = [0, 0, 0], sizes = [1, 16, 16], strides = [1, 1, 1]} : vector<2x16x16xf32> to vector<1x16x16xf32>
    %62 = vector.shape_cast %61 : vector<1x16x16xf32> to vector<16x16xf32>
    "tpu.trace_start"() <{level = 10 : i32, message = "qd,kd->qk"}> : () -> ()
    %cst_23 = arith.constant dense<0.000000e+00> : vector<16x16xf32>
    %63 = tpu.matmul %57, %58, %cst_23 {dimension_numbers = #tpu.dot_dimension_numbers<[1], [1], [0], [0], [0, 0, 1, 0], [], []>} : vector<16x32xf32>, vector<16x32xf32>, vector<16x16xf32> -> vector<16x16xf32>
    "tpu.trace_stop"() : () -> ()
    %64 = arith.mulf %8, %63 : vector<16x16xf32>
    %cst_24 = arith.constant dense<0.000000e+00> : vector<16xf32>
    %65 = vector.multi_reduction <add>, %64, %cst_24 [1] : vector<16x16xf32> to vector<16xf32>
    %66 = vector.shape_cast %65 : vector<16xf32> to vector<16x1xf32>
    %67 = arith.mulf %13, %63 : vector<16x16xf32>
    %cst_25 = arith.constant dense<0.000000e+00> : vector<16xf32>
    %68 = vector.multi_reduction <add>, %67, %cst_25 [1] : vector<16x16xf32> to vector<16xf32>
    %69 = vector.shape_cast %68 : vector<16xf32> to vector<16x1xf32>
    %70 = vector.broadcast %60 : vector<1x16xf32> to vector<16x16xf32>
    %71 = arith.mulf %8, %70 : vector<16x16xf32>
    %cst_26 = arith.constant dense<0.000000e+00> : vector<16xf32>
    %72 = vector.multi_reduction <add>, %71, %cst_26 [1] : vector<16x16xf32> to vector<16xf32>
    %73 = vector.shape_cast %72 : vector<16xf32> to vector<16x1xf32>
    %74 = vector.broadcast %60 : vector<1x16xf32> to vector<16x16xf32>
    %75 = arith.mulf %13, %74 : vector<16x16xf32>
    %cst_27 = arith.constant dense<0.000000e+00> : vector<16xf32>
    %76 = vector.multi_reduction <add>, %75, %cst_27 [1] : vector<16x16xf32> to vector<16xf32>
    %77 = vector.shape_cast %76 : vector<16xf32> to vector<16x1xf32>
    %cst_28 = arith.constant 1.000000e+00 : f32
    %78 = vector.broadcast %cst_28 : f32 to vector<16x1xf32>
    %79 = arith.subf %78, %73 : vector<16x1xf32>
    %cst_29 = arith.constant -1.000000e+09 : f32
    %80 = vector.broadcast %cst_29 : f32 to vector<16x1xf32>
    %81 = arith.mulf %79, %80 : vector<16x1xf32>
    %82 = arith.addf %66, %81 : vector<16x1xf32>
    %cst_30 = arith.constant 1.000000e+00 : f32
    %83 = vector.broadcast %cst_30 : f32 to vector<16x1xf32>
    %84 = arith.subf %83, %77 : vector<16x1xf32>
    %cst_31 = arith.constant -1.000000e+09 : f32
    %85 = vector.broadcast %cst_31 : f32 to vector<16x1xf32>
    %86 = arith.mulf %84, %85 : vector<16x1xf32>
    %87 = arith.addf %69, %86 : vector<16x1xf32>
    %88 = arith.maximumf %82, %87 : vector<16x1xf32>
    %89 = arith.subf %82, %88 : vector<16x1xf32>
    %90 = math.exp %89 : vector<16x1xf32>
    %91 = arith.subf %87, %88 : vector<16x1xf32>
    %92 = math.exp %91 : vector<16x1xf32>
    %93 = arith.addf %90, %92 : vector<16x1xf32>
    %94 = arith.divf %90, %93 : vector<16x1xf32>
    %95 = arith.divf %92, %93 : vector<16x1xf32>
    %96 = vector.broadcast %94 : vector<16x1xf32> to vector<16x16xf32>
    %97 = arith.mulf %8, %96 : vector<16x16xf32>
    %98 = vector.broadcast %95 : vector<16x1xf32> to vector<16x16xf32>
    %99 = arith.mulf %13, %98 : vector<16x16xf32>
    %100 = arith.addf %97, %99 : vector<16x16xf32>
    %101 = arith.addf %73, %77 : vector<16x1xf32>
    %cst_32 = arith.constant 0.000000e+00 : f32
    %102 = vector.broadcast %cst_32 : f32 to vector<16x1xf32>
    %103 = arith.cmpf oeq, %101, %102 : vector<16x1xf32>
    %cst_33 = arith.constant 6.250000e-02 : f32
    %104 = vector.shape_cast %103 : vector<16x1xi1> to vector<16x1xi1>
    %105 = vector.broadcast %104 : vector<16x1xi1> to vector<16x16xi1>
    %106 = vector.broadcast %cst_33 : f32 to vector<16x16xf32>
    %107 = arith.select %105, %106, %100 : vector<16x16xi1>, vector<16x16xf32>
    %108 = tpu.transpose %107, [1, 0] : vector<16x16xf32> -> vector<16x16xf32>
    %109 = arith.mulf %107, %108 : vector<16x16xf32>
    %cst_34 = arith.constant 9.99999971E-10 : f32
    %110 = vector.broadcast %cst_34 : f32 to vector<16x16xf32>
    %111 = arith.addf %109, %110 : vector<16x16xf32>
    %112 = math.sqrt %111 : vector<16x16xf32>
    %cst_35 = arith.constant 1.000000e+00 : f32
    %113 = vector.broadcast %cst_35 : f32 to vector<16x16xf32>
    %114 = arith.subf %113, %62 : vector<16x16xf32>
    %115 = arith.mulf %114, %112 : vector<16x16xf32>
    %116 = arith.addf %62, %115 : vector<16x16xf32>
    %117 = arith.mulf %8, %116 : vector<16x16xf32>
    %cst_36 = arith.constant dense<0.000000e+00> : vector<16xf32>
    %118 = vector.multi_reduction <add>, %117, %cst_36 [1] : vector<16x16xf32> to vector<16xf32>
    %119 = vector.shape_cast %118 : vector<16xf32> to vector<16x1xf32>
    %120 = arith.mulf %8, %116 : vector<16x16xf32>
    %cst_37 = arith.constant dense<0.000000e+00> : vector<16xf32>
    %121 = vector.multi_reduction <add>, %120, %cst_37 [0] : vector<16x16xf32> to vector<16xf32>
    %122 = vector.shape_cast %121 : vector<16xf32> to vector<1x16xf32>
    %cst_38 = arith.constant 9.99999971E-10 : f32
    %123 = vector.broadcast %cst_38 : f32 to vector<16x1xf32>
    %124 = arith.addf %119, %123 : vector<16x1xf32>
    %125 = math.log %124 : vector<16x1xf32>
    %cst_39 = arith.constant 9.99999971E-10 : f32
    %126 = vector.broadcast %cst_39 : f32 to vector<1x16xf32>
    %127 = arith.addf %122, %126 : vector<1x16xf32>
    %128 = math.log %127 : vector<1x16xf32>
    %cst_40 = arith.constant 0.000000e+00 : f32
    %129 = vector.broadcast %cst_40 : f32 to vector<1x16xf32>
    %130 = arith.select %21, %129, %128 : vector<1x16xi1>, vector<1x16xf32>
    %131 = vector.broadcast %125 : vector<16x1xf32> to vector<16x16xf32>
    %132 = arith.mulf %131, %15 : vector<16x16xf32>
    %cst_41 = arith.constant dense<0.000000e+00> : vector<16xf32>
    %133 = vector.multi_reduction <add>, %132, %cst_41 [0] : vector<16x16xf32> to vector<16xf32>
    %134 = vector.shape_cast %133 : vector<16xf32> to vector<1x16xf32>
    %135 = vector.broadcast %130 : vector<1x16xf32> to vector<16x16xf32>
    %136 = arith.mulf %135, %18 : vector<16x16xf32>
    %cst_42 = arith.constant dense<0.000000e+00> : vector<16xf32>
    %137 = vector.multi_reduction <add>, %136, %cst_42 [1] : vector<16x16xf32> to vector<16xf32>
    %138 = vector.shape_cast %137 : vector<16xf32> to vector<16x1xf32>
    %139 = vector.broadcast %134 : vector<1x16xf32> to vector<16x16xf32>
    %140 = vector.broadcast %138 : vector<16x1xf32> to vector<16x16xf32>
    %141 = arith.subf %139, %140 : vector<16x16xf32>
    %142 = arith.mulf %141, %24 : vector<16x16xf32>
    %143 = math.exp %142 : vector<16x16xf32>
    %cst_43 = arith.constant 0.000000e+00 : f32
    %144 = vector.broadcast %cst_43 : f32 to vector<16x16xf32>
    %145 = arith.select %2, %144, %143 : vector<16x16xi1>, vector<16x16xf32>
    %cst_44 = arith.constant 9.99999971E-10 : f32
    %146 = vector.broadcast %cst_44 : f32 to vector<16x16xf32>
    %147 = arith.select %2, %116, %146 : vector<16x16xi1>, vector<16x16xf32>
    %148 = arith.addf %145, %147 : vector<16x16xf32>
    %c0_45 = arith.constant 0 : index
    %c0_46 = arith.constant 0 : index
    %c0_47 = arith.constant 0 : index
    %c0_48 = arith.constant 0 : index
    %149 = vector.load %arg8[%c0_45, %c0_46, %c0_47, %c0_48] : memref<2x2x16x16xf32, #tpu.memory_space<vmem>>, vector<1x1x16x16xf32>
    %150 = vector.shape_cast %149 : vector<1x1x16x16xf32> to vector<16x16xf32>
    %151 = vector.shape_cast %148 : vector<16x16xf32> to vector<1x1x16x16xf32>
    tpu.vector_store %arg8[%c0_45, %c0_46, %c0_47, %c0_48], %151 {strides = array<i32>} : memref<2x2x16x16xf32, #tpu.memory_space<vmem>>, vector<1x1x16x16xf32>,
    %c0_49 = arith.constant 0 : index
    %c1 = arith.constant 1 : index
    %c0_50 = arith.constant 0 : index
    %c0_51 = arith.constant 0 : index
    %152 = vector.load %arg8[%c0_49, %c1, %c0_50, %c0_51] : memref<2x2x16x16xf32, #tpu.memory_space<vmem>>, vector<1x1x16x16xf32>
    %153 = vector.shape_cast %152 : vector<1x1x16x16xf32> to vector<16x16xf32>
    %154 = vector.shape_cast %116 : vector<16x16xf32> to vector<1x1x16x16xf32>
    tpu.vector_store %arg8[%c0_49, %c1, %c0_50, %c0_51], %154 {strides = array<i32>} : memref<2x2x16x16xf32, #tpu.memory_space<vmem>>, vector<1x1x16x16xf32>,
    %155 = vector.extract_strided_slice %54 {offsets = [16, 0], sizes = [16, 32], strides = [1, 1]} : vector<32x64xf32> to vector<16x32xf32>
    %156 = vector.extract_strided_slice %54 {offsets = [16, 32], sizes = [16, 32], strides = [1, 1]} : vector<32x64xf32> to vector<16x32xf32>
    %157 = vector.extract_strided_slice %55 {offsets = [1, 0, 0], sizes = [1, 1, 16], strides = [1, 1, 1]} : vector<2x1x16xf32> to vector<1x1x16xf32>
    %158 = vector.shape_cast %157 : vector<1x1x16xf32> to vector<1x16xf32>
    %159 = vector.extract_strided_slice %56 {offsets = [1, 0, 0], sizes = [1, 16, 16], strides = [1, 1, 1]} : vector<2x16x16xf32> to vector<1x16x16xf32>
    %160 = vector.shape_cast %159 : vector<1x16x16xf32> to vector<16x16xf32>
    "tpu.trace_start"() <{level = 10 : i32, message = "qd,kd->qk"}> : () -> ()
    %cst_52 = arith.constant dense<0.000000e+00> : vector<16x16xf32>
    %161 = tpu.matmul %155, %156, %cst_52 {dimension_numbers = #tpu.dot_dimension_numbers<[1], [1], [0], [0], [0, 0, 1, 0], [], []>} : vector<16x32xf32>, vector<16x32xf32>, vector<16x16xf32> -> vector<16x16xf32>
    "tpu.trace_stop"() : () -> ()
    %162 = arith.mulf %8, %161 : vector<16x16xf32>
    %cst_53 = arith.constant dense<0.000000e+00> : vector<16xf32>
    %163 = vector.multi_reduction <add>, %162, %cst_53 [1] : vector<16x16xf32> to vector<16xf32>
    %164 = vector.shape_cast %163 : vector<16xf32> to vector<16x1xf32>
    %165 = arith.mulf %13, %161 : vector<16x16xf32>
    %cst_54 = arith.constant dense<0.000000e+00> : vector<16xf32>
    %166 = vector.multi_reduction <add>, %165, %cst_54 [1] : vector<16x16xf32> to vector<16xf32>
    %167 = vector.shape_cast %166 : vector<16xf32> to vector<16x1xf32>
    %168 = vector.broadcast %158 : vector<1x16xf32> to vector<16x16xf32>
    %169 = arith.mulf %8, %168 : vector<16x16xf32>
    %cst_55 = arith.constant dense<0.000000e+00> : vector<16xf32>
    %170 = vector.multi_reduction <add>, %169, %cst_55 [1] : vector<16x16xf32> to vector<16xf32>
    %171 = vector.shape_cast %170 : vector<16xf32> to vector<16x1xf32>
    %172 = vector.broadcast %158 : vector<1x16xf32> to vector<16x16xf32>
    %173 = arith.mulf %13, %172 : vector<16x16xf32>
    %cst_56 = arith.constant dense<0.000000e+00> : vector<16xf32>
    %174 = vector.multi_reduction <add>, %173, %cst_56 [1] : vector<16x16xf32> to vector<16xf32>
    %175 = vector.shape_cast %174 : vector<16xf32> to vector<16x1xf32>
    %cst_57 = arith.constant 1.000000e+00 : f32
    %176 = vector.broadcast %cst_57 : f32 to vector<16x1xf32>
    %177 = arith.subf %176, %171 : vector<16x1xf32>
    %cst_58 = arith.constant -1.000000e+09 : f32
    %178 = vector.broadcast %cst_58 : f32 to vector<16x1xf32>
    %179 = arith.mulf %177, %178 : vector<16x1xf32>
    %180 = arith.addf %164, %179 : vector<16x1xf32>
    %cst_59 = arith.constant 1.000000e+00 : f32
    %181 = vector.broadcast %cst_59 : f32 to vector<16x1xf32>
    %182 = arith.subf %181, %175 : vector<16x1xf32>
    %cst_60 = arith.constant -1.000000e+09 : f32
    %183 = vector.broadcast %cst_60 : f32 to vector<16x1xf32>
    %184 = arith.mulf %182, %183 : vector<16x1xf32>
    %185 = arith.addf %167, %184 : vector<16x1xf32>
    %186 = arith.maximumf %180, %185 : vector<16x1xf32>
    %187 = arith.subf %180, %186 : vector<16x1xf32>
    %188 = math.exp %187 : vector<16x1xf32>
    %189 = arith.subf %185, %186 : vector<16x1xf32>
    %190 = math.exp %189 : vector<16x1xf32>
    %191 = arith.addf %188, %190 : vector<16x1xf32>
    %192 = arith.divf %188, %191 : vector<16x1xf32>
    %193 = arith.divf %190, %191 : vector<16x1xf32>
    %194 = vector.broadcast %192 : vector<16x1xf32> to vector<16x16xf32>
    %195 = arith.mulf %8, %194 : vector<16x16xf32>
    %196 = vector.broadcast %193 : vector<16x1xf32> to vector<16x16xf32>
    %197 = arith.mulf %13, %196 : vector<16x16xf32>
    %198 = arith.addf %195, %197 : vector<16x16xf32>
    %199 = arith.addf %171, %175 : vector<16x1xf32>
    %cst_61 = arith.constant 0.000000e+00 : f32
    %200 = vector.broadcast %cst_61 : f32 to vector<16x1xf32>
    %201 = arith.cmpf oeq, %199, %200 : vector<16x1xf32>
    %cst_62 = arith.constant 6.250000e-02 : f32
    %202 = vector.shape_cast %201 : vector<16x1xi1> to vector<16x1xi1>
    %203 = vector.broadcast %202 : vector<16x1xi1> to vector<16x16xi1>
    %204 = vector.broadcast %cst_62 : f32 to vector<16x16xf32>
    %205 = arith.select %203, %204, %198 : vector<16x16xi1>, vector<16x16xf32>
    %206 = tpu.transpose %205, [1, 0] : vector<16x16xf32> -> vector<16x16xf32>
    %207 = arith.mulf %205, %206 : vector<16x16xf32>
    %cst_63 = arith.constant 9.99999971E-10 : f32
    %208 = vector.broadcast %cst_63 : f32 to vector<16x16xf32>
    %209 = arith.addf %207, %208 : vector<16x16xf32>
    %210 = math.sqrt %209 : vector<16x16xf32>
    %cst_64 = arith.constant 1.000000e+00 : f32
    %211 = vector.broadcast %cst_64 : f32 to vector<16x16xf32>
    %212 = arith.subf %211, %160 : vector<16x16xf32>
    %213 = arith.mulf %212, %210 : vector<16x16xf32>
    %214 = arith.addf %160, %213 : vector<16x16xf32>
    %215 = arith.mulf %8, %214 : vector<16x16xf32>
    %cst_65 = arith.constant dense<0.000000e+00> : vector<16xf32>
    %216 = vector.multi_reduction <add>, %215, %cst_65 [1] : vector<16x16xf32> to vector<16xf32>
    %217 = vector.shape_cast %216 : vector<16xf32> to vector<16x1xf32>
    %218 = arith.mulf %8, %214 : vector<16x16xf32>
    %cst_66 = arith.constant dense<0.000000e+00> : vector<16xf32>
    %219 = vector.multi_reduction <add>, %218, %cst_66 [0] : vector<16x16xf32> to vector<16xf32>
    %220 = vector.shape_cast %219 : vector<16xf32> to vector<1x16xf32>
    %cst_67 = arith.constant 9.99999971E-10 : f32
    %221 = vector.broadcast %cst_67 : f32 to vector<16x1xf32>
    %222 = arith.addf %217, %221 : vector<16x1xf32>
    %223 = math.log %222 : vector<16x1xf32>
    %cst_68 = arith.constant 9.99999971E-10 : f32
    %224 = vector.broadcast %cst_68 : f32 to vector<1x16xf32>
    %225 = arith.addf %220, %224 : vector<1x16xf32>
    %226 = math.log %225 : vector<1x16xf32>
    %cst_69 = arith.constant 0.000000e+00 : f32
    %227 = vector.broadcast %cst_69 : f32 to vector<1x16xf32>
    %228 = arith.select %21, %227, %226 : vector<1x16xi1>, vector<1x16xf32>
    %229 = vector.broadcast %223 : vector<16x1xf32> to vector<16x16xf32>
    %230 = arith.mulf %229, %15 : vector<16x16xf32>
    %cst_70 = arith.constant dense<0.000000e+00> : vector<16xf32>
    %231 = vector.multi_reduction <add>, %230, %cst_70 [0] : vector<16x16xf32> to vector<16xf32>
    %232 = vector.shape_cast %231 : vector<16xf32> to vector<1x16xf32>
    %233 = vector.broadcast %228 : vector<1x16xf32> to vector<16x16xf32>
    %234 = arith.mulf %233, %18 : vector<16x16xf32>
    %cst_71 = arith.constant dense<0.000000e+00> : vector<16xf32>
    %235 = vector.multi_reduction <add>, %234, %cst_71 [1] : vector<16x16xf32> to vector<16xf32>
    %236 = vector.shape_cast %235 : vector<16xf32> to vector<16x1xf32>
    %237 = vector.broadcast %232 : vector<1x16xf32> to vector<16x16xf32>
    %238 = vector.broadcast %236 : vector<16x1xf32> to vector<16x16xf32>
    %239 = arith.subf %237, %238 : vector<16x16xf32>
    %240 = arith.mulf %239, %24 : vector<16x16xf32>
    %241 = math.exp %240 : vector<16x16xf32>
    %cst_72 = arith.constant 0.000000e+00 : f32
    %242 = vector.broadcast %cst_72 : f32 to vector<16x16xf32>
    %243 = arith.select %2, %242, %241 : vector<16x16xi1>, vector<16x16xf32>
    %cst_73 = arith.constant 9.99999971E-10 : f32
    %244 = vector.broadcast %cst_73 : f32 to vector<16x16xf32>
    %245 = arith.select %2, %214, %244 : vector<16x16xi1>, vector<16x16xf32>
    %246 = arith.addf %243, %245 : vector<16x16xf32>
    %c1_74 = arith.constant 1 : index
    %c0_75 = arith.constant 0 : index
    %c0_76 = arith.constant 0 : index
    %c0_77 = arith.constant 0 : index
    %247 = vector.load %arg8[%c1_74, %c0_75, %c0_76, %c0_77] : memref<2x2x16x16xf32, #tpu.memory_space<vmem>>, vector<1x1x16x16xf32>
    %248 = vector.shape_cast %247 : vector<1x1x16x16xf32> to vector<16x16xf32>
    %249 = vector.shape_cast %246 : vector<16x16xf32> to vector<1x1x16x16xf32>
    tpu.vector_store %arg8[%c1_74, %c0_75, %c0_76, %c0_77], %249 {strides = array<i32>} : memref<2x2x16x16xf32, #tpu.memory_space<vmem>>, vector<1x1x16x16xf32>,
    %c1_78 = arith.constant 1 : index
    %c1_79 = arith.constant 1 : index
    %c0_80 = arith.constant 0 : index
    %c0_81 = arith.constant 0 : index
    %250 = vector.load %arg8[%c1_78, %c1_79, %c0_80, %c0_81] : memref<2x2x16x16xf32, #tpu.memory_space<vmem>>, vector<1x1x16x16xf32>
    %251 = vector.shape_cast %250 : vector<1x1x16x16xf32> to vector<16x16xf32>
    %252 = vector.shape_cast %214 : vector<16x16xf32> to vector<1x1x16x16xf32>
    tpu.vector_store %arg8[%c1_78, %c1_79, %c0_80, %c0_81], %252 {strides = array<i32>} : memref<2x2x16x16xf32, #tpu.memory_space<vmem>>, vector<1x1x16x16xf32>,
    return
  }
  func.func @transform_0(%arg0: i32) -> (i32, i32) {
    %c0_i32 = arith.constant 0 : i32
    %c0_i32_0 = arith.constant 0 : i32
    return %arg0, %c0_i32 : i32, i32
  }
  func.func @transform_1(%arg0: i32) -> (i32, i32, i32) {
    %c0_i32 = arith.constant 0 : i32
    %c0_i32_0 = arith.constant 0 : i32
    %c0_i32_1 = arith.constant 0 : i32
    return %arg0, %c0_i32, %c0_i32_0 : i32, i32, i32
  }
  func.func @transform_2(%arg0: i32) -> (i32, i32, i32) {
    %c0_i32 = arith.constant 0 : i32
    %c0_i32_0 = arith.constant 0 : i32
    %c0_i32_1 = arith.constant 0 : i32
    return %arg0, %c0_i32, %c0_i32_0 : i32, i32, i32
  }
  func.func @transform_3(%arg0: i32) -> (i32, i32) {
    %c0_i32 = arith.constant 0 : i32
    %c0_i32_0 = arith.constant 0 : i32
    %c0_i32_1 = arith.constant 0 : i32
    return %c0_i32, %c0_i32_0 : i32, i32
  }
  func.func @transform_4(%arg0: i32) -> (i32, i32) {
    %c0_i32 = arith.constant 0 : i32
    %c0_i32_0 = arith.constant 0 : i32
    %c0_i32_1 = arith.constant 0 : i32
    return %c0_i32, %c0_i32_0 : i32, i32
  }
  func.func @transform_5(%arg0: i32) -> (i32, i32) {
    %c0_i32 = arith.constant 0 : i32
    %c0_i32_0 = arith.constant 0 : i32
    %c0_i32_1 = arith.constant 0 : i32
    return %c0_i32, %c0_i32_0 : i32, i32
  }
  func.func @transform_6(%arg0: i32) -> (i32, i32) {
    %c0_i32 = arith.constant 0 : i32
    %c0_i32_0 = arith.constant 0 : i32
    %c0_i32_1 = arith.constant 0 : i32
    return %c0_i32, %c0_i32_0 : i32, i32
  }
  func.func @transform_7(%arg0: i32) -> (i32, i32, i32, i32) {
    %c0_i32 = arith.constant 0 : i32
    %c0_i32_0 = arith.constant 0 : i32
    %c0_i32_1 = arith.constant 0 : i32
    %c0_i32_2 = arith.constant 0 : i32
    return %arg0, %c0_i32, %c0_i32_0, %c0_i32_1 : i32, i32, i32, i32
  }
}

</mosaic_0001>

<llo_original>
// kernel: tpu_custom_call.1
$region0: #{tpu_custom_call.1}
  #allocation0 [shape = 'u32[]', space=smem, size = 0x4, offset = 0x4, fixed_abs, tag = 'smem constant byte address 0x4 - core index']
  #allocation1 [shape = 'u32[144,128]{1,0:T(1,128)}', space=vmem, size = 0x12000, scoped, tag = 'internal scratch']
  %s0 = inlined_call_operand.hbm [shape: f32[32,32], index: 0, kind: input, shape index: {}]
  %s1 = inlined_call_operand.vmem [shape: f32[2,1,16], index: 1, kind: input, shape index: {}]
  %s2 = inlined_call_operand.hbm [shape: f32[2,16,16], index: 2, kind: input, shape index: {}]
  %s3 = inlined_call_operand.vmem [shape: f32[1,32], index: 3, kind: input, shape index: {}]
  %s4 = inlined_call_operand.vmem [shape: f32[1,32], index: 4, kind: input, shape index: {}]
  %s5 = inlined_call_operand.hbm [shape: f32[32,64], index: 5, kind: input, shape index: {}]
  %s6 = inlined_call_operand.vmem [shape: f32[1,64], index: 6, kind: input, shape index: {}]
  %s7 = inlined_call_operand.hbm [shape: f32[2,2,16,16], index: 7, kind: output, shape index: {}]
  %s8 = sld [smem:[#allocation0]]
  $region50: #{tpu_custom_call.1} parent=0
    _
  %s10 = ssub.s32 1, %s8
  %s11 = scalar_select 0, %s10, %s8
  $region1: #{tpu_custom_call.1} parent=0
    #allocation2 [shape = 'u8[16384]{0}', space=vmem, size = 0x4000, scoped, tag = 'input window, operand 0, single buffered']
    #allocation3 [shape = 's32[1]{0}', space=sflag, size = 0x4, scoped, tag = 'scoped memory for tpu_custom_call.1']
    #allocation4 [shape = 's32[1]{0}', space=sflag, size = 0x4, scoped, tag = 'scoped memory for tpu_custom_call.1']
    #allocation5 [shape = 'u8[16384]{0}', space=vmem, size = 0x4000, scoped, tag = 'input window, operand 2, single buffered']
    #allocation6 [shape = 's32[1]{0}', space=sflag, size = 0x4, scoped, tag = 'scoped memory for tpu_custom_call.1']
    #allocation7 [shape = 'u8[16384]{0}', space=vmem, size = 0x4000, scoped, tag = 'input window, operand 5, single buffered']
    #allocation8 [shape = 'u8[32768]{0}', space=vmem, size = 0x8000, scoped, tag = 'output window, operand 0, single buffered']
    %12 = vsyncpa [#allocation3], 0
    %13 = vsyncpa [#allocation6], 0
    %14 = vsyncpa [#allocation4], 0
    // Predicated region
    $region2: #{tpu_custom_call.1} parent=1 // pred_check
      _
    $region3: #{tpu_custom_call.1} parent=1 // pred_check_branch
      %16 = sbr.rel (0) target = $region5
    $region4: #{tpu_custom_call.1} parent=1 // pred_region
      %s18 = ssub.s32 512, 512
      %19 = vsyncadd [#allocation3], %s18
      %s20 = sshll.u32 [#allocation2], 4
      %s21 = int_to_ptr.vmem [resolvable:$true] %s20
      %26 = dma.hbm_to_vmem [thread:$0]  %s0, 512, %s21, [#allocation3], 128, 128, 8
    $region5: #{tpu_custom_call.1} parent=1 // pred_fallthru
      _
    // Predicated region
    $region6: #{tpu_custom_call.1} parent=1 // pred_check
      _
    $region7: #{tpu_custom_call.1} parent=1 // pred_check_branch
      %28 = sbr.rel (0) target = $region9
    $region8: #{tpu_custom_call.1} parent=1 // pred_region
      _
    $region9: #{tpu_custom_call.1} parent=1 // pred_fallthru
      _
    // Predicated region
    $region10: #{tpu_custom_call.1} parent=1 // pred_check
      _
    $region11: #{tpu_custom_call.1} parent=1 // pred_check_branch
      %30 = sbr.rel (0) target = $region13
    $region12: #{tpu_custom_call.1} parent=1 // pred_region
      %s32 = ssub.s32 512, 512
      %33 = vsyncadd [#allocation6], %s32
      %s34 = sshll.u32 [#allocation5], 4
      %s35 = int_to_ptr.vmem [resolvable:$true] %s34
      %40 = dma.hbm_to_vmem [thread:$0]  %s2, 512, %s35, [#allocation6], 128, 128, 8
    $region13: #{tpu_custom_call.1} parent=1 // pred_fallthru
      _
    // Predicated region
    $region14: #{tpu_custom_call.1} parent=1 // pred_check
      _
    $region15: #{tpu_custom_call.1} parent=1 // pred_check_branch
      %42 = sbr.rel (0) target = $region17
    $region16: #{tpu_custom_call.1} parent=1 // pred_region
      _
    $region17: #{tpu_custom_call.1} parent=1 // pred_fallthru
      _
    // Predicated region
    $region18: #{tpu_custom_call.1} parent=1 // pred_check
      _
    $region19: #{tpu_custom_call.1} parent=1 // pred_check_branch
      %44 = sbr.rel (0) target = $region21
    $region20: #{tpu_custom_call.1} parent=1 // pred_region
      _
    $region21: #{tpu_custom_call.1} parent=1 // pred_fallthru
      _
    // Predicated region
    $region22: #{tpu_custom_call.1} parent=1 // pred_check
      _
    $region23: #{tpu_custom_call.1} parent=1 // pred_check_branch
      %46 = sbr.rel (0) target = $region25
    $region24: #{tpu_custom_call.1} parent=1 // pred_region
      %s48 = ssub.s32 512, 512
      %49 = vsyncadd [#allocation6], %s48
      %s50 = sshll.u32 [#allocation7], 4
      %s51 = int_to_ptr.vmem [resolvable:$true] %s50
      %56 = dma.hbm_to_vmem [thread:$0]  %s5, 512, %s51, [#allocation6], 128, 128, 8
    $region25: #{tpu_custom_call.1} parent=1 // pred_fallthru
      _
    // Predicated region
    $region26: #{tpu_custom_call.1} parent=1 // pred_check
      _
    $region27: #{tpu_custom_call.1} parent=1 // pred_check_branch
      %58 = sbr.rel (0) target = $region29
    $region28: #{tpu_custom_call.1} parent=1 // pred_region
      _
    $region29: #{tpu_custom_call.1} parent=1 // pred_fallthru
      _
    // Predicated region
    $region30: #{tpu_custom_call.1} parent=1 // pred_check
      _
    $region31: #{tpu_custom_call.1} parent=1 // pred_check_branch
      %60 = sbr.rel (0) target = $region33
    $region32: #{tpu_custom_call.1} parent=1 // pred_region
      %61 = dma.done [#allocation3], 512
    $region33: #{tpu_custom_call.1} parent=1 // pred_fallthru
      _
    // Predicated region
    $region34: #{tpu_custom_call.1} parent=1 // pred_check
      _
    $region35: #{tpu_custom_call.1} parent=1 // pred_check_branch
      %63 = sbr.rel (0) target = $region37
    $region36: #{tpu_custom_call.1} parent=1 // pred_region
      %64 = dma.done [#allocation6], 512
    $region37: #{tpu_custom_call.1} parent=1 // pred_fallthru
      _
    // Predicated region
    $region38: #{tpu_custom_call.1} parent=1 // pred_check
      _
    $region39: #{tpu_custom_call.1} parent=1 // pred_check_branch
      %66 = sbr.rel (0) target = $region41
    $region40: #{tpu_custom_call.1} parent=1 // pred_region
      %67 = dma.done [#allocation6], 512
    $region41: #{tpu_custom_call.1} parent=1 // pred_fallthru
      _
    %v68 = vlaneseq
    %v69 = vshrl.u32 %v68, 7
    %v70 = vadd.s32 %v69, 8
    %v71 = vlaneseq
    %v72 = vand.u32 %v71, 127
    %vm73 = vcmp.eq.s32.totalorder %v72, %v69
    %vm74 = vcmp.eq.s32.totalorder %v72, %v70
    %vm75 = vcmp.gt.s32.totalorder %v72, %v69
    %vm76 = vcmp.gt.s32.totalorder %v72, %v70
    %v77 = vadd.s32 %v69, 1
    %v78 = vadd.s32 %v70, 1
    %vm79 = vcmp.eq.s32.totalorder %v72, %v77
    %vm80 = vcmp.eq.s32.totalorder %v72, %v78
    %v81 = vsel %vm79, 1, 0
    %v82 = vsel %vm80, 1, 0
    %v83 = vcvt.s32.f32 %v81
    %v84 = vcvt.s32.f32 %v82
    %v85 = vsub.s32 %v69, 1
    %v86 = vsub.s32 %v70, 1
    %vm87 = vcmp.eq.s32.totalorder %v72, %v85
    %vm88 = vcmp.eq.s32.totalorder %v72, %v86
    %v89 = vsel %vm87, 1, 0
    %v90 = vsel %vm88, 1, 0
    %v91 = vcvt.s32.f32 %v89
    %v92 = vcvt.s32.f32 %v90
    %v93 = vsel %vm75, 1, 0
    %v94 = vsel %vm76, 1, 0
    %v95 = vcvt.s32.f32 %v93
    %v96 = vcvt.s32.f32 %v94
    %vm97 = vcmp.le.s32.totalorder %v72, %v69
    %vm98 = vcmp.le.s32.totalorder %v72, %v70
    %v99 = vsel %vm97, 1, 0
    %v100 = vsel %vm98, 1, 0
    %v101 = vcvt.s32.f32 %v99
    %v102 = vcvt.s32.f32 %v100
    %vm103 = vcmp.eq.s32.totalorder %v72, 0
    %v104 = vsel %vm75, 1.0, -1.0
    %v105 = vsel %vm76, 1.0, -1.0
    %v106 = vld [vmem:[#allocation2] sm:$0xff]
    %v107 = vld [vmem:[#allocation2 + $0x8] sm:$0xff]
    %v108 = vld [vmem:[#allocation2 + $0x10] sm:$0xff]
    %v109 = vld [vmem:[#allocation2 + $0x18] sm:$0xff]
    %vm110 = vcmask 261120
    %v111 = vsel %vm110, %v106, 0.0
    %112 = vadd.xlane.f32.xlu0 %v111
    %v113 = vpop.xlane.xlu0 %112
    %v114 = vsel %vm110, %v107, 0.0
    %115 = vadd.xlane.f32.xlu0 %v114
    %v116 = vpop.xlane.xlu0 %115
    %v117 = vsel %vm110, %v108, 0.0
    %118 = vadd.xlane.f32.xlu0 %v117
    %v119 = vpop.xlane.xlu0 %118
    %v120 = vsel %vm110, %v109, 0.0
    %121 = vadd.xlane.f32.xlu0 %v120
    %v122 = vpop.xlane.xlu0 %121
    %v123 = vrcp.pop 32.0
    %v124 = vmul.f32 %v113, %v123
    %v125 = vmul.f32 %v116, %v123
    %v126 = vmul.f32 %v119, %v123
    %v127 = vmul.f32 %v122, %v123
    %v128 = vsub.f32 %v106, %v124
    %v129 = vsub.f32 %v107, %v125
    %v130 = vsub.f32 %v108, %v126
    %v131 = vsub.f32 %v109, %v127
    %v132 = vmul.f32 %v128, %v128
    %v133 = vmul.f32 %v129, %v129
    %v134 = vmul.f32 %v130, %v130
    %v135 = vmul.f32 %v131, %v131
    %v136 = vsel %vm110, %v132, 0.0
    %137 = vadd.xlane.f32.xlu0 %v136
    %v138 = vpop.xlane.xlu0 %137
    %v139 = vsel %vm110, %v133, 0.0
    %140 = vadd.xlane.f32.xlu0 %v139
    %v141 = vpop.xlane.xlu0 %140
    %v142 = vsel %vm110, %v134, 0.0
    %143 = vadd.xlane.f32.xlu0 %v142
    %v144 = vpop.xlane.xlu0 %143
    %v145 = vsel %vm110, %v135, 0.0
    %146 = vadd.xlane.f32.xlu0 %v145
    %v147 = vpop.xlane.xlu0 %146
    %v148 = vmul.f32 %v138, %v123
    %v149 = vmul.f32 %v141, %v123
    %v150 = vmul.f32 %v144, %v123
    %v151 = vmul.f32 %v147, %v123
    %v152 = vadd.f32 %v148, 1e-05
    %v153 = vadd.f32 %v149, 1e-05
    %v154 = vadd.f32 %v150, 1e-05
    %v155 = vadd.f32 %v151, 1e-05
    %v156 = vrsqrt.pop %v152
    %v157 = vrsqrt.pop %v153
    %v158 = vrsqrt.pop %v154
    %v159 = vrsqrt.pop %v155
    %v160 = vmul.f32 %v128, %v156
    %v161 = vmul.f32 %v129, %v157
    %v162 = vmul.f32 %v130, %v158
    %v163 = vmul.f32 %v131, %v159
    %v164 = vld [vmem:[%s3] sm:$0x1]
    %v166 = vlaneseq
    %v167 = vshrl.u32 %v166, 7
    %v168 = vsub.s32 0, %v167
    %v169 = vrot.slane %v164, %v168
    %v171 = vmul.f32 %v160, %v169
    %v172 = vmul.f32 %v161, %v169
    %v173 = vmul.f32 %v162, %v169
    %v174 = vmul.f32 %v163, %v169
    %v175 = vld [vmem:[%s4] sm:$0x1]
    %v177 = vlaneseq
    %v178 = vshrl.u32 %v177, 7
    %v179 = vsub.s32 0, %v178
    %v180 = vrot.slane %v175, %v179
    %v182 = vadd.f32 %v171, %v180
    %v183 = vadd.f32 %v172, %v180
    %v184 = vadd.f32 %v173, %v180
    %v185 = vadd.f32 %v174, %v180
    %v186 = vld [vmem:[#allocation7] sm:$0xff]
    %v187 = vld [vmem:[#allocation7 + $0x8] sm:$0xff]
    %v188 = vld [vmem:[#allocation7 + $0x10] sm:$0xff]
    %v189 = vld [vmem:[#allocation7 + $0x18] sm:$0xff]
    %v190 = vld [vmem:[%s6] sm:$0x1]
    %v192 = vlaneseq
    %v193 = vshrl.u32 %v192, 7
    %v194 = vsub.s32 0, %v193
    %v195 = vrot.slane %v190, %v194
    %v198 = vsel %vm110, %v182, 0
    %v201 = vsel %vm110, %v183, 0
    %v204 = vsel %vm110, %v184, 0
    %v207 = vsel %vm110, %v185, 0
    %209 = vmatprep.subr.mxu0 0.0
    %210 = vmatpush1.msra.mxu0 %v186
    %211 = vmatprep.subr.mxu0 0.0
    %212 = vmatpush1.msra.mxu0 %v187
    %213 = vmatprep.subr.mxu0 0.0
    %214 = vmatpush1.msra.mxu0 %v188
    %215 = vmatprep.subr.mxu0 0.0
    %216 = vmatpush1.msra.mxu0 %v189
    %217 = vmatprep.subr.mxu0 0.0
    %218 = vmatpush1.msra.mxu0 0.0
    %219 = vmatprep.subr.mxu0 0.0
    %220 = vmatpush1.msra.mxu0 0.0
    %221 = vmatprep.subr.mxu0 0.0
    %222 = vmatpush1.msra.mxu0 0.0
    %223 = vmatprep.subr.mxu0 0.0
    %224 = vmatpush1.msra.mxu0 0.0
    %225 = vmatprep.subr.mxu0 0.0
    %226 = vmatpush1.msra.mxu0 0.0
    %227 = vmatprep.subr.mxu0 0.0
    %228 = vmatpush1.msra.mxu0 0.0
    %229 = vmatprep.subr.mxu0 0.0
    %230 = vmatpush1.msra.mxu0 0.0
    %231 = vmatprep.subr.mxu0 0.0
    %232 = vmatpush1.msra.mxu0 0.0
    %233 = vmatprep.subr.mxu0 0.0
    %234 = vmatpush1.msra.mxu0 0.0
    %235 = vmatprep.subr.mxu0 0.0
    %236 = vmatpush1.msra.mxu0 0.0
    %237 = vmatprep.subr.mxu0 0.0
    %238 = vmatpush1.msra.mxu0 0.0
    %239 = vmatprep.subr.mxu0 0.0
    %240 = vmatpush1.msra.mxu0 0.0
    %241 = vmatprep.subr.mxu0 0.0
    %242 = vmatpush1.msra.mxu0 0.0
    %243 = vmatprep.subr.mxu0 0.0
    %244 = vmatpush1.msra.mxu0 0.0
    %245 = vmatprep.subr.mxu0 0.0
    %246 = vmatpush1.msra.mxu0 0.0
    %247 = vmatprep.subr.mxu0 0.0
    %248 = vmatpush1.msra.mxu0 0.0
    %249 = vmatprep.subr.mxu0 0.0
    %250 = vmatpush1.msra.mxu0 0.0
    %251 = vmatprep.subr.mxu0 0.0
    %252 = vmatpush1.msra.mxu0 0.0
    %253 = vmatprep.subr.mxu0 0.0
    %254 = vmatpush1.msra.mxu0 0.0
    %255 = vmatprep.subr.mxu0 0.0
    %256 = vmatpush1.msra.mxu0 0.0
    %257 = vmatprep.subr.mxu0 0.0
    %258 = vmatpush1.msra.mxu0 0.0
    %259 = vmatprep.subr.mxu0 0.0
    %260 = vmatpush1.msra.mxu0 0.0
    %261 = vmatprep.subr.mxu0 0.0
    %262 = vmatpush1.msra.mxu0 0.0
    %263 = vmatprep.subr.mxu0 0.0
    %264 = vmatpush1.msra.mxu0 0.0
    %265 = vmatprep.subr.mxu0 0.0
    %266 = vmatpush1.msra.mxu0 0.0
    %267 = vmatprep.subr.mxu0 0.0
    %268 = vmatpush1.msra.mxu0 0.0
    %269 = vmatprep.subr.mxu0 0.0
    %270 = vmatpush1.msra.mxu0 0.0
    %271 = vmatprep.subr.mxu0 0.0
    %272 = vmatpush1.msra.mxu0 0.0
    %273 = vmatprep.mubr.f32.mxu0 0.0
    %274 = vmatmul.mubr.f32.gmra.mrb[0].mxu0 %v198
    %v275 = vpop.f32.mrb[0].mxu0
    %v276 = vadd.f32 %v195, %v275
    %v277 = vpop.f32.mrb[0].mxu0
    %278 = vmatprep.mubr.f32.mxu0 0.0
    %279 = vmatmul.mubr.f32.gmra.mrb[0].mxu0 %v201
    %v280 = vpop.f32.mrb[0].mxu0
    %v281 = vadd.f32 %v195, %v280
    %v282 = vpop.f32.mrb[0].mxu0
    %283 = vmatprep.mubr.f32.mxu0 0.0
    %284 = vmatmul.mubr.f32.gmra.mrb[0].mxu0 %v204
    %v285 = vpop.f32.mrb[0].mxu0
    %v286 = vadd.f32 %v195, %v285
    %v287 = vpop.f32.mrb[0].mxu0
    %288 = vmatprep.mubr.f32.mxu0 0.0
    %289 = vmatmul.mubr.f32.gmra.mrb[0].mxu0 %v207
    %v290 = vpop.f32.mrb[0].mxu0
    %v291 = vadd.f32 %v195, %v290
    %v292 = vpop.f32.mrb[0].mxu0
    %293 = vdwg.mxu0
    %v294 = vld [vmem:[%s1] sm:$0x1]
    %v295 = vld [vmem:[%s1 + $0x1] sm:$0x1]
    %v296 = vld [vmem:[#allocation5] sm:$0xff]
    %v297 = vld [vmem:[#allocation5 + $0x8] sm:$0xff]
    %v298 = vld [vmem:[#allocation5 + $0x10] sm:$0xff]
    %v299 = vld [vmem:[#allocation5 + $0x18] sm:$0xff]
    %302 = vrot.lane.b32.xlu0 %v276, 96
    %v303 = vpop.permute.xlu0 %302
    %304 = vrot.lane.b32.xlu0 %v281, 96
    %v305 = vpop.permute.xlu0 %304
    %v306 = vsel %vm110, %v276, 0
    %v308 = vsel %vm110, %v281, 0
    %v310 = vsel %vm110, %v303, 0
    %v312 = vsel %vm110, %v305, 0
    %314 = vmatprep.subr.mxu0 0.0
    %315 = vmatpush1.xpose.msra.mxu0 %v310
    %316 = vmatprep.subr.mxu0 0.0
    %317 = vmatpush1.xpose.msra.mxu0 %v312
    %318 = vmatprep.subr.mxu0 0.0
    %319 = vmatpush1.xpose.msra.mxu0 0.0
    %320 = vmatprep.subr.mxu0 0.0
    %321 = vmatpush1.xpose.msra.mxu0 0.0
    %322 = vmatprep.subr.mxu0 0.0
    %323 = vmatpush1.xpose.msra.mxu0 0.0
    %324 = vmatprep.subr.mxu0 0.0
    %325 = vmatpush1.xpose.msra.mxu0 0.0
    %326 = vmatprep.subr.mxu0 0.0
    %327 = vmatpush1.xpose.msra.mxu0 0.0
    %328 = vmatprep.subr.mxu0 0.0
    %329 = vmatpush1.xpose.msra.mxu0 0.0
    %330 = vmatprep.subr.mxu0 0.0
    %331 = vmatpush1.xpose.msra.mxu0 0.0
    %332 = vmatprep.subr.mxu0 0.0
    %333 = vmatpush1.xpose.msra.mxu0 0.0
    %334 = vmatprep.subr.mxu0 0.0
    %335 = vmatpush1.xpose.msra.mxu0 0.0
    %336 = vmatprep.subr.mxu0 0.0
    %337 = vmatpush1.xpose.msra.mxu0 0.0
    %338 = vmatprep.subr.mxu0 0.0
    %339 = vmatpush1.xpose.msra.mxu0 0.0
    %340 = vmatprep.subr.mxu0 0.0
    %341 = vmatpush1.xpose.msra.mxu0 0.0
    %342 = vmatprep.subr.mxu0 0.0
    %343 = vmatpush1.xpose.msra.mxu0 0.0
    %344 = vmatprep.subr.mxu0 0.0
    %345 = vmatpush1.xpose.msra.mxu0 0.0
    %346 = vmatprep.subr.mxu0 0.0
    %347 = vmatpush1.xpose.msra.mxu0 0.0
    %348 = vmatprep.subr.mxu0 0.0
    %349 = vmatpush1.xpose.msra.mxu0 0.0
    %350 = vmatprep.subr.mxu0 0.0
    %351 = vmatpush1.xpose.msra.mxu0 0.0
    %352 = vmatprep.subr.mxu0 0.0
    %353 = vmatpush1.xpose.msra.mxu0 0.0
    %354 = vmatprep.subr.mxu0 0.0
    %355 = vmatpush1.xpose.msra.mxu0 0.0
    %356 = vmatprep.subr.mxu0 0.0
    %357 = vmatpush1.xpose.msra.mxu0 0.0
    %358 = vmatprep.subr.mxu0 0.0
    %359 = vmatpush1.xpose.msra.mxu0 0.0
    %360 = vmatprep.subr.mxu0 0.0
    %361 = vmatpush1.xpose.msra.mxu0 0.0
    %362 = vmatprep.subr.mxu0 0.0
    %363 = vmatpush1.xpose.msra.mxu0 0.0
    %364 = vmatprep.subr.mxu0 0.0
    %365 = vmatpush1.xpose.msra.mxu0 0.0
    %366 = vmatprep.subr.mxu0 0.0
    %367 = vmatpush1.xpose.msra.mxu0 0.0
    %368 = vmatprep.subr.mxu0 0.0
    %369 = vmatpush1.xpose.msra.mxu0 0.0
    %370 = vmatprep.subr.mxu0 0.0
    %371 = vmatpush1.xpose.msra.mxu0 0.0
    %372 = vmatprep.subr.mxu0 0.0
    %373 = vmatpush1.xpose.msra.mxu0 0.0
    %374 = vmatprep.subr.mxu0 0.0
    %375 = vmatpush1.xpose.msra.mxu0 0.0
    %376 = vmatprep.subr.mxu0 0.0
    %377 = vmatpush1.xpose.msra.mxu0 0.0
    %378 = vmatprep.mubr.f32.mxu0 0.0
    %379 = vmatmul.mubr.f32.gmra.mrb[0].mxu0 %v306
    %v380 = vpop.f32.mrb[0].mxu0
    %v381 = vadd.f32 0.0, %v380
    %v382 = vpop.f32.mrb[0].mxu0
    %383 = vmatprep.mubr.f32.mxu0 0.0
    %384 = vmatmul.mubr.f32.gmra.mrb[0].mxu0 %v308
    %v385 = vpop.f32.mrb[0].mxu0
    %v386 = vadd.f32 0.0, %v385
    %v387 = vpop.f32.mrb[0].mxu0
    %388 = vdwg.mxu0
    %v389 = vmul.f32 %v83, %v381
    %v390 = vmul.f32 %v84, %v386
    %vm391 = vcmask 130048
    %v392 = vsel %vm391, %v389, 0.0
    %393 = vadd.xlane.f32.xlu0 %v392
    %v394 = vpop.xlane.xlu0 %393
    %v395 = vsel %vm391, %v390, 0.0
    %396 = vadd.xlane.f32.xlu0 %v395
    %v397 = vpop.xlane.xlu0 %396
    %v398 = vmul.f32 %v91, %v381
    %v399 = vmul.f32 %v92, %v386
    %v400 = vsel %vm391, %v398, 0.0
    %401 = vadd.xlane.f32.xlu0 %v400
    %v402 = vpop.xlane.xlu0 %401
    %v403 = vsel %vm391, %v399, 0.0
    %404 = vadd.xlane.f32.xlu0 %v403
    %v405 = vpop.xlane.xlu0 %404
    %v407 = vlaneseq
    %v408 = vshrl.u32 %v407, 7
    %v409 = vsub.s32 0, %v408
    %v410 = vrot.slane %v294, %v409
    %v412 = vmul.f32 %v83, %v410
    %v413 = vmul.f32 %v84, %v410
    %v414 = vsel %vm391, %v412, 0.0
    %415 = vadd.xlane.f32.xlu0 %v414
    %v416 = vpop.xlane.xlu0 %415
    %v417 = vsel %vm391, %v413, 0.0
    %418 = vadd.xlane.f32.xlu0 %v417
    %v419 = vpop.xlane.xlu0 %418
    %v420 = vmul.f32 %v91, %v410
    %v421 = vmul.f32 %v92, %v410
    %v422 = vsel %vm391, %v420, 0.0
    %423 = vadd.xlane.f32.xlu0 %v422
    %v424 = vpop.xlane.xlu0 %423
    %v425 = vsel %vm391, %v421, 0.0
    %426 = vadd.xlane.f32.xlu0 %v425
    %v427 = vpop.xlane.xlu0 %426
    %v428 = vsub.f32 1.0, %v416
    %v429 = vsub.f32 1.0, %v419
    %v430 = vmul.f32 %v428, -1e+09
    %v431 = vmul.f32 %v429, -1e+09
    %v432 = vadd.f32 %v394, %v430
    %v433 = vadd.f32 %v397, %v431
    %v434 = vsub.f32 1.0, %v424
    %v435 = vsub.f32 1.0, %v427
    %v436 = vmul.f32 %v434, -1e+09
    %v437 = vmul.f32 %v435, -1e+09
    %v438 = vadd.f32 %v402, %v436
    %v439 = vadd.f32 %v405, %v437
    %v440 = vmax.f32 %v432, %v438
    %v441 = vmax.f32 %v433, %v439
    %v442 = vsub.f32 %v432, %v440
    %v443 = vsub.f32 %v433, %v441
    %v444 = vmul.f32 %v442, 1.442695
    %v445 = vpow.pop %v444
    %v446 = vmul.f32 %v443, 1.442695
    %v447 = vpow.pop %v446
    %v448 = vsub.f32 %v438, %v440
    %v449 = vsub.f32 %v439, %v441
    %v450 = vmul.f32 %v448, 1.442695
    %v451 = vpow.pop %v450
    %v452 = vmul.f32 %v449, 1.442695
    %v453 = vpow.pop %v452
    %v454 = vadd.f32 %v445, %v451
    %v455 = vadd.f32 %v447, %v453
    %v456 = vrcp.pop %v454
    %v457 = vmul.f32 %v445, %v456
    %v458 = vrcp.pop %v455
    %v459 = vmul.f32 %v447, %v458
    %v460 = vmul.f32 %v451, %v456
    %v461 = vmul.f32 %v453, %v458
    %v462 = vmul.f32 %v83, %v457
    %v463 = vmul.f32 %v84, %v459
    %v464 = vmul.f32 %v91, %v460
    %v465 = vmul.f32 %v92, %v461
    %v466 = vadd.f32 %v462, %v464
    %v467 = vadd.f32 %v463, %v465
    %v468 = vadd.f32 %v416, %v424
    %v469 = vadd.f32 %v419, %v427
    %vm470 = vcmp.eq.f32.partialorder %v468, 0.0
    %vm471 = vcmp.eq.f32.partialorder %v469, 0.0
    %v472 = vsel %vm470, 1, 0
    %v473 = vsel %vm471, 1, 0
    %vm474 = vcmp.eq.s32.totalorder %v472, 1
    %vm475 = vcmp.eq.s32.totalorder %v473, 1
    %v476 = vsel %vm474, 0.0625, %v466
    %v477 = vsel %vm475, 0.0625, %v467
    %478 = vxpose.xlu0.b32.start [1/16] %v476, 128
    %479 = vxpose.xlu0.b32.cont [2/16] %v477, 128
    %480 = vxpose.xlu0.b32.cont [3/16] 0.0, 128
    %481 = vxpose.xlu0.b32.cont [4/16] 0.0, 128
    %482 = vxpose.xlu0.b32.cont [5/16] 0.0, 128
    %483 = vxpose.xlu0.b32.cont [6/16] 0.0, 128
    %484 = vxpose.xlu0.b32.cont [7/16] 0.0, 128
    %485 = vxpose.xlu0.b32.cont [8/16] 0.0, 128
    %486 = vxpose.xlu0.b32.cont [9/16] 0.0, 128
    %487 = vxpose.xlu0.b32.cont [10/16] 0.0, 128
    %488 = vxpose.xlu0.b32.cont [11/16] 0.0, 128
    %489 = vxpose.xlu0.b32.cont [12/16] 0.0, 128
    %490 = vxpose.xlu0.b32.cont [13/16] 0.0, 128
    %491 = vxpose.xlu0.b32.cont [14/16] 0.0, 128
    %492 = vxpose.xlu0.b32.cont [15/16] 0.0, 128
    %493 = vxpose.xlu0.b32.end [16/16] 0.0, 128
    %v494 = vpop.trf.xlu0
    %v495 = vpop.trf.xlu0
    %v496 = vpop.trf.xlu0
    %v497 = vpop.trf.xlu0
    %v498 = vpop.trf.xlu0
    %v499 = vpop.trf.xlu0
    %v500 = vpop.trf.xlu0
    %v501 = vpop.trf.xlu0
    %v502 = vpop.trf.xlu0
    %v503 = vpop.trf.xlu0
    %v504 = vpop.trf.xlu0
    %v505 = vpop.trf.xlu0
    %v506 = vpop.trf.xlu0
    %v507 = vpop.trf.xlu0
    %v508 = vpop.trf.xlu0
    %v509 = vpop.trf.xlu0
    %v510 = vmul.f32 %v476, %v494
    %v511 = vmul.f32 %v477, %v495
    %v512 = vadd.f32 %v510, 1e-09
    %v513 = vadd.f32 %v511, 1e-09
    %v514 = vrsqrt.pop %v512
    %v515 = vmul.f32 %v512, %v514
    %vm516 = vcmp.eq.f32.partialorder %v512, inf
    %v517 = vsel %vm516, %v512, %v515
    %vm518 = vcmp.eq.f32.partialorder %v512, 0.0
    %v519 = vand.u32 %v512, 2147483648
    %v520 = vsel %vm518, %v519, %v517
    %v521 = vrsqrt.pop %v513
    %v522 = vmul.f32 %v513, %v521
    %vm523 = vcmp.eq.f32.partialorder %v513, inf
    %v524 = vsel %vm523, %v513, %v522
    %vm525 = vcmp.eq.f32.partialorder %v513, 0.0
    %v526 = vand.u32 %v513, 2147483648
    %v527 = vsel %vm525, %v526, %v524
    %v528 = vsub.f32 1.0, %v296
    %v529 = vsub.f32 1.0, %v297
    %v530 = vmul.f32 %v528, %v520
    %v531 = vmul.f32 %v529, %v527
    %v532 = vadd.f32 %v296, %v530
    %v533 = vadd.f32 %v297, %v531
    %v534 = vmul.f32 %v83, %v532
    %v535 = vmul.f32 %v84, %v533
    %v536 = vsel %vm391, %v534, 0.0
    %537 = vadd.xlane.f32.xlu0 %v536
    %v538 = vpop.xlane.xlu0 %537
    %v539 = vsel %vm391, %v535, 0.0
    %540 = vadd.xlane.f32.xlu0 %v539
    %v541 = vpop.xlane.xlu0 %540
    %v542 = vadd.f32 %v536, %v539
    %v543 = vrot.slane %v542, 4
    %v544 = vadd.f32 %v542, %v543
    %v545 = vrot.slane %v544, 2
    %v546 = vadd.f32 %v544, %v545
    %v547 = vrot.slane %v546, 1
    %v548 = vadd.f32 %v546, %v547
    %v549 = vadd.f32 %v538, 1e-09
    %v550 = vadd.f32 %v541, 1e-09
    %v551 = vlog2.pop %v549
    %v552 = vmul.f32 %v551, 0.6931472
    %v553 = vlog2.pop %v550
    %v554 = vmul.f32 %v553, 0.6931472
    %v555 = vadd.f32 %v548, 1e-09
    %v556 = vlog2.pop %v555
    %v557 = vmul.f32 %v556, 0.6931472
    %v558 = vsel %vm103, 0.0, %v557
    %v559 = vmul.f32 %v552, %v95
    %v560 = vmul.f32 %v554, %v96
    %v561 = vsel %vm391, %v559, 0.0
    %v562 = vsel %vm391, %v560, 0.0
    %v563 = vadd.f32 %v561, %v562
    %v564 = vrot.slane %v563, 4
    %v565 = vadd.f32 %v563, %v564
    %v566 = vrot.slane %v565, 2
    %v567 = vadd.f32 %v565, %v566
    %v568 = vrot.slane %v567, 1
    %v569 = vadd.f32 %v567, %v568
    %v570 = vmul.f32 %v558, %v101
    %v571 = vmul.f32 %v558, %v102
    %v572 = vsel %vm391, %v570, 0.0
    %573 = vadd.xlane.f32.xlu0 %v572
    %v574 = vpop.xlane.xlu0 %573
    %v575 = vsel %vm391, %v571, 0.0
    %576 = vadd.xlane.f32.xlu0 %v575
    %v577 = vpop.xlane.xlu0 %576
    %v578 = vsub.f32 %v569, %v574
    %v579 = vsub.f32 %v569, %v577
    %v580 = vmul.f32 %v578, %v104
    %v581 = vmul.f32 %v579, %v105
    %v582 = vmul.f32 %v580, 1.442695
    %v583 = vpow.pop %v582
    %v584 = vmul.f32 %v581, 1.442695
    %v585 = vpow.pop %v584
    %v586 = vsel %vm73, 0.0, %v583
    %v587 = vsel %vm74, 0.0, %v585
    %v588 = vsel %vm73, %v532, 1e-09
    %v589 = vsel %vm74, %v533, 1e-09
    %v590 = vadd.f32 %v586, %v588
    %v591 = vadd.f32 %v587, %v589
    %592 = vst.msk [vmem:[#allocation8] sm:$0xff] %vm391, %v590
    %593 = vst.msk [vmem:[#allocation8 + $0x8] sm:$0xff] %vm391, %v591
    %s594 = scalar_lea.vmem [#allocation8], 16
    %595 = vst.msk [vmem:[%s594] sm:$0xff] %vm391, %v532
    %596 = vst.msk [vmem:[%s594 + $0x8] sm:$0xff] %vm391, %v533
    %599 = vrot.lane.b32.xlu0 %v286, 96
    %v600 = vpop.permute.xlu0 %599
    %601 = vrot.lane.b32.xlu0 %v291, 96
    %v602 = vpop.permute.xlu0 %601
    %v603 = vsel %vm110, %v286, 0
    %v605 = vsel %vm110, %v291, 0
    %v607 = vsel %vm110, %v600, 0
    %v609 = vsel %vm110, %v602, 0
    %611 = vmatprep.subr.mxu0 0.0
    %612 = vmatpush1.xpose.msra.mxu0 %v607
    %613 = vmatprep.subr.mxu0 0.0
    %614 = vmatpush1.xpose.msra.mxu0 %v609
    %615 = vmatprep.subr.mxu0 0.0
    %616 = vmatpush1.xpose.msra.mxu0 0.0
    %617 = vmatprep.subr.mxu0 0.0
    %618 = vmatpush1.xpose.msra.mxu0 0.0
    %619 = vmatprep.subr.mxu0 0.0
    %620 = vmatpush1.xpose.msra.mxu0 0.0
    %621 = vmatprep.subr.mxu0 0.0
    %622 = vmatpush1.xpose.msra.mxu0 0.0
    %623 = vmatprep.subr.mxu0 0.0
    %624 = vmatpush1.xpose.msra.mxu0 0.0
    %625 = vmatprep.subr.mxu0 0.0
    %626 = vmatpush1.xpose.msra.mxu0 0.0
    %627 = vmatprep.subr.mxu0 0.0
    %628 = vmatpush1.xpose.msra.mxu0 0.0
    %629 = vmatprep.subr.mxu0 0.0
    %630 = vmatpush1.xpose.msra.mxu0 0.0
    %631 = vmatprep.subr.mxu0 0.0
    %632 = vmatpush1.xpose.msra.mxu0 0.0
    %633 = vmatprep.subr.mxu0 0.0
    %634 = vmatpush1.xpose.msra.mxu0 0.0
    %635 = vmatprep.subr.mxu0 0.0
    %636 = vmatpush1.xpose.msra.mxu0 0.0
    %637 = vmatprep.subr.mxu0 0.0
    %638 = vmatpush1.xpose.msra.mxu0 0.0
    %639 = vmatprep.subr.mxu0 0.0
    %640 = vmatpush1.xpose.msra.mxu0 0.0
    %641 = vmatprep.subr.mxu0 0.0
    %642 = vmatpush1.xpose.msra.mxu0 0.0
    %643 = vmatprep.subr.mxu0 0.0
    %644 = vmatpush1.xpose.msra.mxu0 0.0
    %645 = vmatprep.subr.mxu0 0.0
    %646 = vmatpush1.xpose.msra.mxu0 0.0
    %647 = vmatprep.subr.mxu0 0.0
    %648 = vmatpush1.xpose.msra.mxu0 0.0
    %649 = vmatprep.subr.mxu0 0.0
    %650 = vmatpush1.xpose.msra.mxu0 0.0
    %651 = vmatprep.subr.mxu0 0.0
    %652 = vmatpush1.xpose.msra.mxu0 0.0
    %653 = vmatprep.subr.mxu0 0.0
    %654 = vmatpush1.xpose.msra.mxu0 0.0
    %655 = vmatprep.subr.mxu0 0.0
    %656 = vmatpush1.xpose.msra.mxu0 0.0
    %657 = vmatprep.subr.mxu0 0.0
    %658 = vmatpush1.xpose.msra.mxu0 0.0
    %659 = vmatprep.subr.mxu0 0.0
    %660 = vmatpush1.xpose.msra.mxu0 0.0
    %661 = vmatprep.subr.mxu0 0.0
    %662 = vmatpush1.xpose.msra.mxu0 0.0
    %663 = vmatprep.subr.mxu0 0.0
    %664 = vmatpush1.xpose.msra.mxu0 0.0
    %665 = vmatprep.subr.mxu0 0.0
    %666 = vmatpush1.xpose.msra.mxu0 0.0
    %667 = vmatprep.subr.mxu0 0.0
    %668 = vmatpush1.xpose.msra.mxu0 0.0
    %669 = vmatprep.subr.mxu0 0.0
    %670 = vmatpush1.xpose.msra.mxu0 0.0
    %671 = vmatprep.subr.mxu0 0.0
    %672 = vmatpush1.xpose.msra.mxu0 0.0
    %673 = vmatprep.subr.mxu0 0.0
    %674 = vmatpush1.xpose.msra.mxu0 0.0
    %675 = vmatprep.mubr.f32.mxu0 0.0
    %676 = vmatmul.mubr.f32.gmra.mrb[0].mxu0 %v603
    %v677 = vpop.f32.mrb[0].mxu0
    %v678 = vadd.f32 0.0, %v677
    %v679 = vpop.f32.mrb[0].mxu0
    %680 = vmatprep.mubr.f32.mxu0 0.0
    %681 = vmatmul.mubr.f32.gmra.mrb[0].mxu0 %v605
    %v682 = vpop.f32.mrb[0].mxu0
    %v683 = vadd.f32 0.0, %v682
    %v684 = vpop.f32.mrb[0].mxu0
    %685 = vdwg.mxu0
    %v686 = vmul.f32 %v83, %v678
    %v687 = vmul.f32 %v84, %v683
    %v688 = vsel %vm391, %v686, 0.0
    %689 = vadd.xlane.f32.xlu0 %v688
    %v690 = vpop.xlane.xlu0 %689
    %v691 = vsel %vm391, %v687, 0.0
    %692 = vadd.xlane.f32.xlu0 %v691
    %v693 = vpop.xlane.xlu0 %692
    %v694 = vmul.f32 %v91, %v678
    %v695 = vmul.f32 %v92, %v683
    %v696 = vsel %vm391, %v694, 0.0
    %697 = vadd.xlane.f32.xlu0 %v696
    %v698 = vpop.xlane.xlu0 %697
    %v699 = vsel %vm391, %v695, 0.0
    %700 = vadd.xlane.f32.xlu0 %v699
    %v701 = vpop.xlane.xlu0 %700
    %v703 = vlaneseq
    %v704 = vshrl.u32 %v703, 7
    %v705 = vsub.s32 0, %v704
    %v706 = vrot.slane %v295, %v705
    %v708 = vmul.f32 %v83, %v706
    %v709 = vmul.f32 %v84, %v706
    %v710 = vsel %vm391, %v708, 0.0
    %711 = vadd.xlane.f32.xlu0 %v710
    %v712 = vpop.xlane.xlu0 %711
    %v713 = vsel %vm391, %v709, 0.0
    %714 = vadd.xlane.f32.xlu0 %v713
    %v715 = vpop.xlane.xlu0 %714
    %v716 = vmul.f32 %v91, %v706
    %v717 = vmul.f32 %v92, %v706
    %v718 = vsel %vm391, %v716, 0.0
    %719 = vadd.xlane.f32.xlu0 %v718
    %v720 = vpop.xlane.xlu0 %719
    %v721 = vsel %vm391, %v717, 0.0
    %722 = vadd.xlane.f32.xlu0 %v721
    %v723 = vpop.xlane.xlu0 %722
    %v724 = vsub.f32 1.0, %v712
    %v725 = vsub.f32 1.0, %v715
    %v726 = vmul.f32 %v724, -1e+09
    %v727 = vmul.f32 %v725, -1e+09
    %v728 = vadd.f32 %v690, %v726
    %v729 = vadd.f32 %v693, %v727
    %v730 = vsub.f32 1.0, %v720
    %v731 = vsub.f32 1.0, %v723
    %v732 = vmul.f32 %v730, -1e+09
    %v733 = vmul.f32 %v731, -1e+09
    %v734 = vadd.f32 %v698, %v732
    %v735 = vadd.f32 %v701, %v733
    %v736 = vmax.f32 %v728, %v734
    %v737 = vmax.f32 %v729, %v735
    %v738 = vsub.f32 %v728, %v736
    %v739 = vsub.f32 %v729, %v737
    %v740 = vmul.f32 %v738, 1.442695
    %v741 = vpow.pop %v740
    %v742 = vmul.f32 %v739, 1.442695
    %v743 = vpow.pop %v742
    %v744 = vsub.f32 %v734, %v736
    %v745 = vsub.f32 %v735, %v737
    %v746 = vmul.f32 %v744, 1.442695
    %v747 = vpow.pop %v746
    %v748 = vmul.f32 %v745, 1.442695
    %v749 = vpow.pop %v748
    %v750 = vadd.f32 %v741, %v747
    %v751 = vadd.f32 %v743, %v749
    %v752 = vrcp.pop %v750
    %v753 = vmul.f32 %v741, %v752
    %v754 = vrcp.pop %v751
    %v755 = vmul.f32 %v743, %v754
    %v756 = vmul.f32 %v747, %v752
    %v757 = vmul.f32 %v749, %v754
    %v758 = vmul.f32 %v83, %v753
    %v759 = vmul.f32 %v84, %v755
    %v760 = vmul.f32 %v91, %v756
    %v761 = vmul.f32 %v92, %v757
    %v762 = vadd.f32 %v758, %v760
    %v763 = vadd.f32 %v759, %v761
    %v764 = vadd.f32 %v712, %v720
    %v765 = vadd.f32 %v715, %v723
    %vm766 = vcmp.eq.f32.partialorder %v764, 0.0
    %vm767 = vcmp.eq.f32.partialorder %v765, 0.0
    %v768 = vsel %vm766, 1, 0
    %v769 = vsel %vm767, 1, 0
    %vm770 = vcmp.eq.s32.totalorder %v768, 1
    %vm771 = vcmp.eq.s32.totalorder %v769, 1
    %v772 = vsel %vm770, 0.0625, %v762
    %v773 = vsel %vm771, 0.0625, %v763
    %774 = vxpose.xlu0.b32.start [1/16] %v772, 128
    %775 = vxpose.xlu0.b32.cont [2/16] %v773, 128
    %776 = vxpose.xlu0.b32.cont [3/16] 0.0, 128
    %777 = vxpose.xlu0.b32.cont [4/16] 0.0, 128
    %778 = vxpose.xlu0.b32.cont [5/16] 0.0, 128
    %779 = vxpose.xlu0.b32.cont [6/16] 0.0, 128
    %780 = vxpose.xlu0.b32.cont [7/16] 0.0, 128
    %781 = vxpose.xlu0.b32.cont [8/16] 0.0, 128
    %782 = vxpose.xlu0.b32.cont [9/16] 0.0, 128
    %783 = vxpose.xlu0.b32.cont [10/16] 0.0, 128
    %784 = vxpose.xlu0.b32.cont [11/16] 0.0, 128
    %785 = vxpose.xlu0.b32.cont [12/16] 0.0, 128
    %786 = vxpose.xlu0.b32.cont [13/16] 0.0, 128
    %787 = vxpose.xlu0.b32.cont [14/16] 0.0, 128
    %788 = vxpose.xlu0.b32.cont [15/16] 0.0, 128
    %789 = vxpose.xlu0.b32.end [16/16] 0.0, 128
    %v790 = vpop.trf.xlu0
    %v791 = vpop.trf.xlu0
    %v792 = vpop.trf.xlu0
    %v793 = vpop.trf.xlu0
    %v794 = vpop.trf.xlu0
    %v795 = vpop.trf.xlu0
    %v796 = vpop.trf.xlu0
    %v797 = vpop.trf.xlu0
    %v798 = vpop.trf.xlu0
    %v799 = vpop.trf.xlu0
    %v800 = vpop.trf.xlu0
    %v801 = vpop.trf.xlu0
    %v802 = vpop.trf.xlu0
    %v803 = vpop.trf.xlu0
    %v804 = vpop.trf.xlu0
    %v805 = vpop.trf.xlu0
    %v806 = vmul.f32 %v772, %v790
    %v807 = vmul.f32 %v773, %v791
    %v808 = vadd.f32 %v806, 1e-09
    %v809 = vadd.f32 %v807, 1e-09
    %v810 = vrsqrt.pop %v808
    %v811 = vmul.f32 %v808, %v810
    %vm812 = vcmp.eq.f32.partialorder %v808, inf
    %v813 = vsel %vm812, %v808, %v811
    %vm814 = vcmp.eq.f32.partialorder %v808, 0.0
    %v815 = vand.u32 %v808, 2147483648
    %v816 = vsel %vm814, %v815, %v813
    %v817 = vrsqrt.pop %v809
    %v818 = vmul.f32 %v809, %v817
    %vm819 = vcmp.eq.f32.partialorder %v809, inf
    %v820 = vsel %vm819, %v809, %v818
    %vm821 = vcmp.eq.f32.partialorder %v809, 0.0
    %v822 = vand.u32 %v809, 2147483648
    %v823 = vsel %vm821, %v822, %v820
    %v824 = vsub.f32 1.0, %v298
    %v825 = vsub.f32 1.0, %v299
    %v826 = vmul.f32 %v824, %v816
    %v827 = vmul.f32 %v825, %v823
    %v828 = vadd.f32 %v298, %v826
    %v829 = vadd.f32 %v299, %v827
    %v830 = vmul.f32 %v83, %v828
    %v831 = vmul.f32 %v84, %v829
    %v832 = vsel %vm391, %v830, 0.0
    %833 = vadd.xlane.f32.xlu0 %v832
    %v834 = vpop.xlane.xlu0 %833
    %v835 = vsel %vm391, %v831, 0.0
    %836 = vadd.xlane.f32.xlu0 %v835
    %v837 = vpop.xlane.xlu0 %836
    %v838 = vadd.f32 %v832, %v835
    %v839 = vrot.slane %v838, 4
    %v840 = vadd.f32 %v838, %v839
    %v841 = vrot.slane %v840, 2
    %v842 = vadd.f32 %v840, %v841
    %v843 = vrot.slane %v842, 1
    %v844 = vadd.f32 %v842, %v843
    %v845 = vadd.f32 %v834, 1e-09
    %v846 = vadd.f32 %v837, 1e-09
    %v847 = vlog2.pop %v845
    %v848 = vmul.f32 %v847, 0.6931472
    %v849 = vlog2.pop %v846
    %v850 = vmul.f32 %v849, 0.6931472
    %v851 = vadd.f32 %v844, 1e-09
    %v852 = vlog2.pop %v851
    %v853 = vmul.f32 %v852, 0.6931472
    %v854 = vsel %vm103, 0.0, %v853
    %v855 = vmul.f32 %v848, %v95
    %v856 = vmul.f32 %v850, %v96
    %v857 = vsel %vm391, %v855, 0.0
    %v858 = vsel %vm391, %v856, 0.0
    %v859 = vadd.f32 %v857, %v858
    %v860 = vrot.slane %v859, 4
    %v861 = vadd.f32 %v859, %v860
    %v862 = vrot.slane %v861, 2
    %v863 = vadd.f32 %v861, %v862
    %v864 = vrot.slane %v863, 1
    %v865 = vadd.f32 %v863, %v864
    %v866 = vmul.f32 %v854, %v101
    %v867 = vmul.f32 %v854, %v102
    %v868 = vsel %vm391, %v866, 0.0
    %869 = vadd.xlane.f32.xlu0 %v868
    %v870 = vpop.xlane.xlu0 %869
    %v871 = vsel %vm391, %v867, 0.0
    %872 = vadd.xlane.f32.xlu0 %v871
    %v873 = vpop.xlane.xlu0 %872
    %v874 = vsub.f32 %v865, %v870
    %v875 = vsub.f32 %v865, %v873
    %v876 = vmul.f32 %v874, %v104
    %v877 = vmul.f32 %v875, %v105
    %v878 = vmul.f32 %v876, 1.442695
    %v879 = vpow.pop %v878
    %v880 = vmul.f32 %v877, 1.442695
    %v881 = vpow.pop %v880
    %v882 = vsel %vm73, 0.0, %v879
    %v883 = vsel %vm74, 0.0, %v881
    %v884 = vsel %vm73, %v828, 1e-09
    %v885 = vsel %vm74, %v829, 1e-09
    %v886 = vadd.f32 %v882, %v884
    %v887 = vadd.f32 %v883, %v885
    %s888 = scalar_lea.vmem [#allocation8], 32
    %889 = vst.msk [vmem:[%s888] sm:$0xff] %vm391, %v886
    %890 = vst.msk [vmem:[%s888 + $0x8] sm:$0xff] %vm391, %v887
    %s891 = scalar_lea.vmem [#allocation8], 48
    %892 = vst.msk [vmem:[%s891] sm:$0xff] %vm391, %v828
    %893 = vst.msk [vmem:[%s891 + $0x8] sm:$0xff] %vm391, %v829
    // Predicated region
    $region42: #{tpu_custom_call.1} parent=1 // pred_check
      _
    $region43: #{tpu_custom_call.1} parent=1 // pred_check_branch
      %895 = sbr.rel (0) target = $region45
    $region44: #{tpu_custom_call.1} parent=1 // pred_region
      %s897 = ssub.s32 1024, 1024
      %898 = vsyncadd [#allocation4], %s897
      %s899 = sshll.u32 [#allocation8], 4
      %s900 = int_to_ptr.vmem [resolvable:$true] %s899
      %905 = dma.vmem_to_hbm [thread:$0]  %s900, 1024, %s7, [#allocation4], 128, 128, 8
    $region45: #{tpu_custom_call.1} parent=1 // pred_fallthru
      _
    // Predicated region
    $region46: #{tpu_custom_call.1} parent=1 // pred_check
      _
    $region47: #{tpu_custom_call.1} parent=1 // pred_check_branch
      %907 = sbr.rel (0) target = $region49
    $region48: #{tpu_custom_call.1} parent=1 // pred_region
      %908 = dma.done [#allocation4], 1024
    $region49: #{tpu_custom_call.1} parent=1 // pred_fallthru
      _
    %909 = vsyncpa [#allocation3], 1
    %910 = vsyncpa [#allocation6], 1
    %911 = vsyncpa [#allocation4], 1

</llo_original>
